<compile_context>
chip_gen: v7x
topology: tpu7x:2x2x1
jax: 0.10.0
libtpu: 0.0.40
codegen_flags: <defaults>
</compile_context>

<pallas_src>
import functools

import jax
import jax.numpy as jnp
from jax import lax
from jax.experimental import pallas as pl
from jax.experimental.pallas import tpu as pltpu


NUM_CLASSES = 4      # len(IEMOCAP_TAGS) — standard 4-way IEMOCAP emotion set
FEATURE_DIM = 768    # self.feature_dim in the module
LANE = 128


def _round_up(n, m):
    return (n + m - 1) // m * m


def fuse_head_weights(w_proj, b_proj, w_cls, b_cls):
    """One-time (per checkpoint) weight prep; cache the result across calls.

    logits = mean_t(x @ Wp^T + bp) @ Wc^T + bc
           = (sum_t x) * (1/T) @ (Wp^T @ Wc^T) + (bp @ Wc^T + bc)

    The 1/T scale is applied in-kernel, so the fused weights are T-independent.
    Returns (w_fused (D, Cp) f32, b_fused (1, Cp) f32), lane-padded to 128 so
    the kernel's output store is lane-dense.
    """
    C = w_cls.shape[0]
    wp = jnp.asarray(w_proj, jnp.float32)
    wc = jnp.asarray(w_cls, jnp.float32)
    w_f = wp.T @ wc.T                                                 # (D, C)
    b_f = jnp.asarray(b_proj, jnp.float32) @ wc.T \
        + jnp.asarray(b_cls, jnp.float32)                             # (C,)
    Cp = _round_up(max(C, LANE), LANE)
    w_f = jnp.pad(w_f, ((0, 0), (0, Cp - C)))
    b_f = jnp.pad(b_f, (0, Cp - C)).reshape(1, Cp)
    return w_f, b_f


def _head_kernel(x_ref, w_ref, b_ref, o_ref, acc_ref, *,
                 t_total, tt, inv_t, mask_t_tail):
    """Grid = (batch tiles ['parallel'], T tiles ['arbitrary' reduction]).

    x_ref  : (tb, tt, D)   chunk of last_hidden (streamed over T, any dtype)
    w_ref  : (D, Cp)       fused projector@classifier weight (resident)
    b_ref  : (1, Cp)       fused bias (lane-padded)
    o_ref  : (tb, Cp)      lane-padded logits (resident across the T axis)
    acc_ref: (tb, D) f32   running time-sum of x
    """
    t = pl.program_id(1)

    @pl.when(t == 0)
    def _():
        acc_ref[...] = jnp.zeros_like(acc_ref)

    xf = x_ref[...].astype(jnp.float32)                        # (tb, tt, D)
    if mask_t_tail:
        # Last T tile is partial: out-of-bounds rows hold unspecified data,
        # so zero them before they enter the time-sum. t_total/tt are static.
        tpos = t * tt + lax.broadcasted_iota(jnp.int32, xf.shape, 1)
        xf = jnp.where(tpos < t_total, xf, 0.0)
    acc_ref[...] += jnp.sum(xf, axis=1)

    @pl.when(t == pl.num_programs(1) - 1)
    def _():
        # Tiny epilogue: mean scale + fused projector/classifier matmul + bias.
        logits = jnp.dot(acc_ref[...] * jnp.float32(inv_t), w_ref[...],
                         preferred_element_type=jnp.float32)
        o_ref[...] = (logits + b_ref[...]).astype(o_ref.dtype)


def audio_model_head_fused(last_hidden, w_fused, b_fused, num_classes, *,
                           tb=8, tt=None):
    """AudioModel head from last_hidden_state, using pre-fused weights.

    last_hidden : (B, T, D)  wav2vec2 last_hidden_state (f32 or bf16)
    w_fused     : (D, Cp)    from fuse_head_weights
    b_fused     : (1, Cp)
    """
    B, T, D = last_hidden.shape
    Cp = w_fused.shape[1]
    itemsize = jnp.dtype(last_hidden.dtype).itemsize

    # --- tiling --------------------------------------------------------------
    # Streamed T tile: big enough to amortize per-step overhead, small enough
    # that the double-buffer stays well under v5e's/v7x's VMEM scopes.
    if tt is None:
        tt = 512 if itemsize <= 2 else 256
    tt = min(tt, T)              # tt == T (full dim) or a multiple of 8
    tb = min(tb, B)              # tb == B (full dim) or a multiple of 8
    if B > 8:
        # keep >= 2 'parallel' batch tiles so both v7x TensorCores get work
        tb = min(tb, _round_up(B, 16) // 2)

    grid = (pl.cdiv(B, tb), pl.cdiv(T, tt))
    mask_t_tail = (T % tt) != 0

    kernel = functools.partial(_head_kernel, t_total=T, tt=tt, inv_t=1.0 / T,
                               mask_t_tail=mask_t_tail)

    cost = pl.CostEstimate(
        flops=int(B * T * D + 2 * B * D * Cp),
        transcendentals=0,
        bytes_accessed=int(B * T * D * itemsize + D * Cp * 4 + Cp * 4
                           + B * Cp * 4),
    )

    out = pl.pallas_call(
        kernel,
        out_shape=jax.ShapeDtypeStruct((B, Cp), jnp.float32),
        grid_spec=pltpu.PrefetchScalarGridSpec(
            num_scalar_prefetch=0,
            grid=grid,
            in_specs=[
                pl.BlockSpec((tb, tt, D), lambda b, t: (b, t, 0)),  # x stream
                pl.BlockSpec((D, Cp), lambda b, t: (0, 0)),         # fused W
                pl.BlockSpec((1, Cp), lambda b, t: (0, 0)),         # fused bias
            ],
            out_specs=pl.BlockSpec((tb, Cp), lambda b, t: (b, 0)),  # resident over t
            scratch_shapes=[pltpu.VMEM((tb, D), jnp.float32)],
        ),
        compiler_params=pltpu.CompilerParams(
            dimension_semantics=("parallel", "arbitrary"),
            vmem_limit_bytes=32 * 1024 * 1024,
        ),
        cost_estimate=cost,
    )(last_hidden, w_fused, b_fused)

    return out[:, :num_classes]


def audio_model_head(last_hidden, w_proj, b_proj, w_cls, b_cls, **kw):
    """Convenience wrapper: fuses weights per call (prefer caching the fusion)."""
    w_f, b_f = fuse_head_weights(w_proj, b_proj, w_cls, b_cls)
    return audio_model_head_fused(last_hidden, w_f, b_f, w_cls.shape[0], **kw)


def reference_head(last_hidden, w_proj, b_proj, w_cls, b_cls):
    """Pure-JAX mirror of the PyTorch forward (from last_hidden onward)."""
    h = jnp.einsum("btd,ed->bte", last_hidden.astype(jnp.float32), w_proj) + b_proj
    p = h.mean(axis=1)
    return p @ w_cls.T + b_cls


if __name__ == "__main__":
    key = jax.random.PRNGKey(0)
    k_x, k_wp, k_bp, k_wc, k_bc = jax.random.split(key, 5)

    B, T, D, C = 2, 12, FEATURE_DIM, NUM_CLASSES

    # stand-in for wav2vec2(...)['last_hidden_state']
    last_hidden = jax.random.normal(k_x, (B, T, D), dtype=jnp.float32)

    # deterministic Linear params, PyTorch convention: weight (out, in)
    lim = 1.0 / (D ** 0.5)
    w_proj = jax.random.uniform(k_wp, (D, D), jnp.float32, -lim, lim)
    b_proj = jax.random.uniform(k_bp, (D,), jnp.float32, -lim, lim)
    w_cls = jax.random.uniform(k_wc, (C, D), jnp.float32, -lim, lim)
    b_cls = jax.random.uniform(k_bc, (C,), jnp.float32, -lim, lim)

    ref = reference_head(last_hidden, w_proj, b_proj, w_cls, b_cls)

    # one-time weight fusion (cached per checkpoint in real use)
    w_f, b_f = fuse_head_weights(w_proj, b_proj, w_cls, b_cls)

    # 1) default tiling (tt == T, no tail mask)
    logits = jax.block_until_ready(audio_model_head_fused(last_hidden, w_f, b_f, C))
    assert logits.shape == (B, C), logits.shape
    assert jnp.allclose(logits, ref, atol=1e-4, rtol=1e-4), (logits, ref)

    # 2) forced small T tile so the masked partial-tail path is exercised
    logits2 = jax.block_until_ready(
        audio_model_head_fused(last_hidden, w_f, b_f, C, tt=8))
    assert jnp.allclose(logits2, ref, atol=1e-4, rtol=1e-4), (logits2, ref)

    # 3) bf16 activations (half the HBM read volume; accumulation stays f32)
    logits_bf16 = jax.block_until_ready(
        audio_model_head_fused(last_hidden.astype(jnp.bfloat16), w_f, b_f, C))
    assert jnp.allclose(logits_bf16, ref, atol=5e-2, rtol=5e-2), (logits_bf16, ref)

    print("KERNEL_OK")
</pallas_src>

<mosaic_0001>
module attributes {stable_mosaic.version = 11 : i64} {
  func.func @_head_kernel(%arg0: i32, %arg1: i32, %arg2: memref<2x12x768xf32, #tpu.memory_space<vmem>>, %arg3: memref<768x128xf32, #tpu.memory_space<vmem>>, %arg4: memref<1x128xf32, #tpu.memory_space<vmem>>, %arg5: memref<2x128xf32, #tpu.memory_space<vmem>>, %arg6: memref<2x768xf32, #tpu.memory_space<vmem>>) attributes {dimension_semantics = [#tpu.dimension_semantics<parallel>, #tpu.dimension_semantics<arbitrary>], iteration_bounds = array<i64: 1, 1>, scalar_prefetch = 0 : i64, scratch_operands = 1 : i64, tpu.core_type = #tpu.core_type<tc>, window_params = [{transform_indices = @transform_0, window_bounds = array<i64: 2, 12, 768>}, {pipeline_mode = #tpu.pipeline_mode<synchronous>, transform_indices = @transform_1, window_bounds = array<i64: 768, 128>}, {pipeline_mode = #tpu.pipeline_mode<synchronous>, transform_indices = @transform_2, window_bounds = array<i64: 1, 128>}, {transform_indices = @transform_3, window_bounds = array<i64: 2, 128>}]} {
    %c0_i32 = arith.constant 0 : i32
    %0 = arith.cmpi eq, %arg1, %c0_i32 : i32
    %1 = arith.extui %0 : i1 to i32
    %c0_i32_0 = arith.constant 0 : i32
    %2 = arith.cmpi ne, %1, %c0_i32_0 : i32
    scf.if %2 {
      %cst_9 = arith.constant 0.000000e+00 : f32
      %11 = vector.broadcast %cst_9 : f32 to vector<2x768xf32>
      %c0_10 = arith.constant 0 : index
      %c0_11 = arith.constant 0 : index
      %12 = vector.load %arg6[%c0_10, %c0_11] : memref<2x768xf32, #tpu.memory_space<vmem>>, vector<2x768xf32>
      tpu.vector_store %arg6[%c0_10, %c0_11], %11 {strides = array<i32>} : memref<2x768xf32, #tpu.memory_space<vmem>>, vector<2x768xf32>,
    } else {
    }
    %c0 = arith.constant 0 : index
    %c0_1 = arith.constant 0 : index
    %c0_2 = arith.constant 0 : index
    %3 = vector.load %arg2[%c0, %c0_1, %c0_2] : memref<2x12x768xf32, #tpu.memory_space<vmem>>, vector<2x12x768xf32>
    %c0_3 = arith.constant 0 : index
    %c0_4 = arith.constant 0 : index
    %4 = vector.load %arg6[%c0_3, %c0_4] : memref<2x768xf32, #tpu.memory_space<vmem>>, vector<2x768xf32>
    %cst = arith.constant dense<0.000000e+00> : vector<2x768xf32>
    %5 = vector.multi_reduction <add>, %3, %cst [1] : vector<2x12x768xf32> to vector<2x768xf32>
    %6 = arith.addf %4, %5 : vector<2x768xf32>
    %c0_5 = arith.constant 0 : index
    %c0_6 = arith.constant 0 : index
    %7 = vector.load %arg6[%c0_5, %c0_6] : memref<2x768xf32, #tpu.memory_space<vmem>>, vector<2x768xf32>
    tpu.vector_store %arg6[%c0_5, %c0_6], %6 {strides = array<i32>} : memref<2x768xf32, #tpu.memory_space<vmem>>, vector<2x768xf32>,
    %c0_i32_7 = arith.constant 0 : i32
    %8 = arith.cmpi eq, %arg1, %c0_i32_7 : i32
    %9 = arith.extui %8 : i1 to i32
    %c0_i32_8 = arith.constant 0 : i32
    %10 = arith.cmpi ne, %9, %c0_i32_8 : i32
    scf.if %10 {
      %c0_9 = arith.constant 0 : index
      %c0_10 = arith.constant 0 : index
      %11 = vector.load %arg6[%c0_9, %c0_10] : memref<2x768xf32, #tpu.memory_space<vmem>>, vector<2x768xf32>
      %cst_11 = arith.constant 0.0833333358 : f32
      %12 = vector.broadcast %cst_11 : f32 to vector<2x768xf32>
      %13 = arith.mulf %11, %12 : vector<2x768xf32>
      %c0_12 = arith.constant 0 : index
      %c0_13 = arith.constant 0 : index
      %14 = vector.load %arg3[%c0_12, %c0_13] : memref<768x128xf32, #tpu.memory_space<vmem>>, vector<768x128xf32>
      %cst_14 = arith.constant dense<0.000000e+00> : vector<2x128xf32>
      %15 = tpu.matmul %13, %14, %cst_14 {dimension_numbers = #tpu.dot_dimension_numbers<[1], [0], [0], [1], [0, 0, 1, 1], [], []>} : vector<2x768xf32>, vector<768x128xf32>, vector<2x128xf32> -> vector<2x128xf32>
      %c0_15 = arith.constant 0 : index
      %c0_16 = arith.constant 0 : index
      %16 = vector.load %arg4[%c0_15, %c0_16] : memref<1x128xf32, #tpu.memory_space<vmem>>, vector<1x128xf32>
      %17 = vector.broadcast %16 : vector<1x128xf32> to vector<2x128xf32>
      %18 = arith.addf %15, %17 : vector<2x128xf32>
      %c0_17 = arith.constant 0 : index
      %c0_18 = arith.constant 0 : index
      %19 = vector.load %arg5[%c0_17, %c0_18] : memref<2x128xf32, #tpu.memory_space<vmem>>, vector<2x128xf32>
      tpu.vector_store %arg5[%c0_17, %c0_18], %18 {strides = array<i32>} : memref<2x128xf32, #tpu.memory_space<vmem>>, vector<2x128xf32>,
    } else {
    }
    return
  }
  func.func @transform_0(%arg0: i32, %arg1: i32) -> (i32, i32, i32) {
    %c0_i32 = arith.constant 0 : i32
    %c0_i32_0 = arith.constant 0 : i32
    return %arg0, %arg1, %c0_i32 : i32, i32, i32
  }
  func.func @transform_1(%arg0: i32, %arg1: i32) -> (i32, i32) {
    %c0_i32 = arith.constant 0 : i32
    %c0_i32_0 = arith.constant 0 : i32
    %c0_i32_1 = arith.constant 0 : i32
    return %c0_i32, %c0_i32_0 : i32, i32
  }
  func.func @transform_2(%arg0: i32, %arg1: i32) -> (i32, i32) {
    %c0_i32 = arith.constant 0 : i32
    %c0_i32_0 = arith.constant 0 : i32
    %c0_i32_1 = arith.constant 0 : i32
    return %c0_i32, %c0_i32_0 : i32, i32
  }
  func.func @transform_3(%arg0: i32, %arg1: i32) -> (i32, i32) {
    %c0_i32 = arith.constant 0 : i32
    %c0_i32_0 = arith.constant 0 : i32
    return %arg0, %c0_i32 : i32, i32
  }
}

</mosaic_0001>

<llo_original>
// kernel: tpu_custom_call.1
$region0: #{tpu_custom_call.1}
  #allocation0 [shape = 'u32[]', space=smem, size = 0x4, offset = 0x4, fixed_abs, tag = 'smem constant byte address 0x4 - core index']
  #allocation1 [shape = 'u32[144,128]{1,0:T(1,128)}', space=vmem, size = 0x12000, scoped, tag = 'internal scratch']
  #allocation2 [shape = 'f32[2,768]{1,0:T(2,128)}', space=vmem, size = 0x1800, scoped, tag = 'scratch operand']
  %s0 = inlined_call_operand.vmem [shape: f32[2,12,768], index: 0, kind: input, shape index: {}]
  %s1 = inlined_call_operand.hbm [shape: f32[768,128], index: 1, kind: input, shape index: {}]
  %s2 = inlined_call_operand.vmem [shape: f32[1,128], index: 2, kind: input, shape index: {}]
  %s3 = inlined_call_operand.hbm [shape: f32[2,128], index: 3, kind: output, shape index: {}]
  %s4 = sld [smem:[#allocation0]]
  $region34: #{tpu_custom_call.1} parent=0
    _
  %s6 = ssub.s32 1, %s4
  %s7 = scalar_select 0, %s6, %s4
  $region1: #{tpu_custom_call.1} parent=0
    #allocation3 [shape = 'u8[393216]{0}', space=vmem, size = 0x60000, scoped, tag = 'input window, operand 1, single buffered']
    #allocation4 [shape = 's32[1]{0}', space=sflag, size = 0x4, scoped, tag = 'scoped memory for tpu_custom_call.1']
    #allocation5 [shape = 's32[1]{0}', space=sflag, size = 0x4, scoped, tag = 'scoped memory for tpu_custom_call.1']
    #allocation6 [shape = 'u8[1024]{0}', space=vmem, size = 0x400, scoped, tag = 'output window, operand 0, single buffered']
    %8 = vsyncpa [#allocation4], 0
    %9 = vsyncpa [#allocation5], 0
    // Predicated region
    $region2: #{tpu_custom_call.1} parent=1 // pred_check
      _
    $region3: #{tpu_custom_call.1} parent=1 // pred_check_branch
      %11 = sbr.rel (0) target = $region5
    $region4: #{tpu_custom_call.1} parent=1 // pred_region
      _
    $region5: #{tpu_custom_call.1} parent=1 // pred_fallthru
      _
    // Predicated region
    $region6: #{tpu_custom_call.1} parent=1 // pred_check
      _
    $region7: #{tpu_custom_call.1} parent=1 // pred_check_branch
      %13 = sbr.rel (0) target = $region9
    $region8: #{tpu_custom_call.1} parent=1 // pred_region
      %s15 = ssub.s32 12288, 12288
      %16 = vsyncadd [#allocation4], %s15
      %s17 = sshll.u32 [#allocation3], 4
      %s18 = int_to_ptr.vmem [resolvable:$true] %s17
      %23 = dma.hbm_to_vmem [thread:$0]  %s1, 12288, %s18, [#allocation4], 128, 128, 8
    $region9: #{tpu_custom_call.1} parent=1 // pred_fallthru
      _
    // Predicated region
    $region10: #{tpu_custom_call.1} parent=1 // pred_check
      _
    $region11: #{tpu_custom_call.1} parent=1 // pred_check_branch
      %25 = sbr.rel (0) target = $region13
    $region12: #{tpu_custom_call.1} parent=1 // pred_region
      _
    $region13: #{tpu_custom_call.1} parent=1 // pred_fallthru
      _
    // Predicated region
    $region14: #{tpu_custom_call.1} parent=1 // pred_check
      _
    $region15: #{tpu_custom_call.1} parent=1 // pred_check_branch
      %27 = sbr.rel (0) target = $region17
    $region16: #{tpu_custom_call.1} parent=1 // pred_region
      %28 = dma.done [#allocation4], 12288
    $region17: #{tpu_custom_call.1} parent=1 // pred_fallthru
      _
    %p29 = scmp.eq.s32.totalorder 0, 0
    // Predicated region
    $region18: #{tpu_custom_call.1} parent=1 // pred_check
      %p30 = pneg %p29
    $region19: #{tpu_custom_call.1} parent=1 // pred_check_branch
      %32 = sbr.rel (%p30) target = $region21
    $region20: #{tpu_custom_call.1} parent=1 // pred_region
      %33 = vst [vmem:[#allocation2] sm:$0xff] 0.0
      %34 = vst [vmem:[#allocation2 + $0x8] sm:$0xf] 0.0
    $region21: #{tpu_custom_call.1} parent=1 // pred_fallthru
      _
    %v35 = vld [vmem:[%s0] sm:$0xff]
    %v36 = vld [vmem:[%s0 + $0x8] sm:$0xff]
    %v37 = vld [vmem:[%s0 + $0x10] sm:$0xff]
    %v38 = vld [vmem:[%s0 + $0x18] sm:$0xff]
    %v39 = vld [vmem:[%s0 + $0x20] sm:$0xff]
    %v40 = vld [vmem:[%s0 + $0x28] sm:$0xff]
    %v41 = vld [vmem:[%s0 + $0x30] sm:$0xf]
    %v42 = vld [vmem:[%s0 + $0x38] sm:$0xf]
    %v43 = vld [vmem:[%s0 + $0x40] sm:$0xf]
    %v44 = vld [vmem:[%s0 + $0x48] sm:$0xf]
    %v45 = vld [vmem:[%s0 + $0x50] sm:$0xf]
    %v46 = vld [vmem:[%s0 + $0x58] sm:$0xf]
    %v47 = vld [vmem:[%s0 + $0x60] sm:$0xff]
    %v48 = vld [vmem:[%s0 + $0x68] sm:$0xff]
    %v49 = vld [vmem:[%s0 + $0x70] sm:$0xff]
    %v50 = vld [vmem:[%s0 + $0x78] sm:$0xff]
    %v51 = vld [vmem:[%s0 + $0x80] sm:$0xff]
    %v52 = vld [vmem:[%s0 + $0x88] sm:$0xff]
    %v53 = vld [vmem:[%s0 + $0x90] sm:$0xf]
    %v54 = vld [vmem:[%s0 + $0x98] sm:$0xf]
    %v55 = vld [vmem:[%s0 + $0xa0] sm:$0xf]
    %v56 = vld [vmem:[%s0 + $0xa8] sm:$0xf]
    %v57 = vld [vmem:[%s0 + $0xb0] sm:$0xf]
    %v58 = vld [vmem:[%s0 + $0xb8] sm:$0xf]
    %v59 = vld [vmem:[#allocation2] sm:$0xff]
    %v60 = vld [vmem:[#allocation2 + $0x8] sm:$0xf]
    %vm61 = vcmask 1043456
    %v62 = vsel %vm61, %v41, 0.0
    %v63 = vadd.f32 %v35, %v62
    %v64 = vrot.slane %v63, 4
    %v65 = vadd.f32 %v63, %v64
    %v66 = vrot.slane %v65, 2
    %v67 = vadd.f32 %v65, %v66
    %v68 = vrot.slane %v67, 1
    %v69 = vadd.f32 %v67, %v68
    %v70 = vsel %vm61, %v42, 0.0
    %v71 = vadd.f32 %v36, %v70
    %v72 = vrot.slane %v71, 4
    %v73 = vadd.f32 %v71, %v72
    %v74 = vrot.slane %v73, 2
    %v75 = vadd.f32 %v73, %v74
    %v76 = vrot.slane %v75, 1
    %v77 = vadd.f32 %v75, %v76
    %v78 = vsel %vm61, %v43, 0.0
    %v79 = vadd.f32 %v37, %v78
    %v80 = vrot.slane %v79, 4
    %v81 = vadd.f32 %v79, %v80
    %v82 = vrot.slane %v81, 2
    %v83 = vadd.f32 %v81, %v82
    %v84 = vrot.slane %v83, 1
    %v85 = vadd.f32 %v83, %v84
    %v86 = vsel %vm61, %v44, 0.0
    %v87 = vadd.f32 %v38, %v86
    %v88 = vrot.slane %v87, 4
    %v89 = vadd.f32 %v87, %v88
    %v90 = vrot.slane %v89, 2
    %v91 = vadd.f32 %v89, %v90
    %v92 = vrot.slane %v91, 1
    %v93 = vadd.f32 %v91, %v92
    %v94 = vsel %vm61, %v45, 0.0
    %v95 = vadd.f32 %v39, %v94
    %v96 = vrot.slane %v95, 4
    %v97 = vadd.f32 %v95, %v96
    %v98 = vrot.slane %v97, 2
    %v99 = vadd.f32 %v97, %v98
    %v100 = vrot.slane %v99, 1
    %v101 = vadd.f32 %v99, %v100
    %v102 = vsel %vm61, %v46, 0.0
    %v103 = vadd.f32 %v40, %v102
    %v104 = vrot.slane %v103, 4
    %v105 = vadd.f32 %v103, %v104
    %v106 = vrot.slane %v105, 2
    %v107 = vadd.f32 %v105, %v106
    %v108 = vrot.slane %v107, 1
    %v109 = vadd.f32 %v107, %v108
    %v110 = vsel %vm61, %v53, 0.0
    %v111 = vadd.f32 %v47, %v110
    %v112 = vrot.slane %v111, 4
    %v113 = vadd.f32 %v111, %v112
    %v114 = vrot.slane %v113, 2
    %v115 = vadd.f32 %v113, %v114
    %v116 = vrot.slane %v115, 1
    %v117 = vadd.f32 %v115, %v116
    %v118 = vsel %vm61, %v54, 0.0
    %v119 = vadd.f32 %v48, %v118
    %v120 = vrot.slane %v119, 4
    %v121 = vadd.f32 %v119, %v120
    %v122 = vrot.slane %v121, 2
    %v123 = vadd.f32 %v121, %v122
    %v124 = vrot.slane %v123, 1
    %v125 = vadd.f32 %v123, %v124
    %v126 = vsel %vm61, %v55, 0.0
    %v127 = vadd.f32 %v49, %v126
    %v128 = vrot.slane %v127, 4
    %v129 = vadd.f32 %v127, %v128
    %v130 = vrot.slane %v129, 2
    %v131 = vadd.f32 %v129, %v130
    %v132 = vrot.slane %v131, 1
    %v133 = vadd.f32 %v131, %v132
    %v134 = vsel %vm61, %v56, 0.0
    %v135 = vadd.f32 %v50, %v134
    %v136 = vrot.slane %v135, 4
    %v137 = vadd.f32 %v135, %v136
    %v138 = vrot.slane %v137, 2
    %v139 = vadd.f32 %v137, %v138
    %v140 = vrot.slane %v139, 1
    %v141 = vadd.f32 %v139, %v140
    %v142 = vsel %vm61, %v57, 0.0
    %v143 = vadd.f32 %v51, %v142
    %v144 = vrot.slane %v143, 4
    %v145 = vadd.f32 %v143, %v144
    %v146 = vrot.slane %v145, 2
    %v147 = vadd.f32 %v145, %v146
    %v148 = vrot.slane %v147, 1
    %v149 = vadd.f32 %v147, %v148
    %v150 = vsel %vm61, %v58, 0.0
    %v151 = vadd.f32 %v52, %v150
    %v152 = vrot.slane %v151, 4
    %v153 = vadd.f32 %v151, %v152
    %v154 = vrot.slane %v153, 2
    %v155 = vadd.f32 %v153, %v154
    %v156 = vrot.slane %v155, 1
    %v157 = vadd.f32 %v155, %v156
    %v170 = vcombine.low %v69, %v77
    %v171 = vcombine.low %v85, %v93
    %v173 = vunpack.c.l.s4 1983009808
    %v174 = vunpack.c.0.s8 %v173
    %v175 = vlaneseq
    %v176 = vshrl.u32 %v175, 7
    %v177 = vsub.s32 %v174, %v176
    %v178 = vrot.slane %v170, %v177
    %v180 = vunpack.c.l.s4 1983009808
    %v181 = vunpack.c.0.s8 %v180
    %v182 = vlaneseq
    %v183 = vshrl.u32 %v182, 7
    %v184 = vsub.s32 %v181, %v183
    %v185 = vrot.slane %v171, %v184
    %v186 = vcombine.low %v178, %v185
    %v187 = vcombine.low %v101, %v109
    %v189 = vunpack.c.l.s4 1983009808
    %v190 = vunpack.c.0.s8 %v189
    %v191 = vlaneseq
    %v192 = vshrl.u32 %v191, 7
    %v193 = vsub.s32 %v190, %v192
    %v194 = vrot.slane %v187, %v193
    %v195 = vcombine.low %v117, %v125
    %v196 = vcombine.low %v133, %v141
    %v198 = vunpack.c.l.s4 1983009808
    %v199 = vunpack.c.0.s8 %v198
    %v200 = vlaneseq
    %v201 = vshrl.u32 %v200, 7
    %v202 = vsub.s32 %v199, %v201
    %v203 = vrot.slane %v195, %v202
    %v205 = vunpack.c.l.s4 1983009808
    %v206 = vunpack.c.0.s8 %v205
    %v207 = vlaneseq
    %v208 = vshrl.u32 %v207, 7
    %v209 = vsub.s32 %v206, %v208
    %v210 = vrot.slane %v196, %v209
    %v211 = vcombine.low %v203, %v210
    %v212 = vcombine.low %v149, %v157
    %v214 = vunpack.c.l.s4 1983009808
    %v215 = vunpack.c.0.s8 %v214
    %v216 = vlaneseq
    %v217 = vshrl.u32 %v216, 7
    %v218 = vsub.s32 %v215, %v217
    %v219 = vrot.slane %v212, %v218
    %vm220 = vcmask 1044484
    %v221 = vsel %vm220, %v186, %v186
    %vm222 = vcmask 1046534
    %v223 = vsel %vm222, %v186, %v221
    %v224 = vrot.slane %v211, 7
    %vm225 = vcmask 1041409
    %v226 = vsel %vm225, %v224, %v223
    %vm227 = vcmask 1043459
    %v228 = vsel %vm227, %v224, %v226
    %vm229 = vcmask 1045509
    %v230 = vsel %vm229, %v224, %v228
    %vm231 = vcmask 1047559
    %v232 = vsel %vm231, %v224, %v230
    %v233 = vsel %vm220, %v194, %v194
    %v234 = vsel %vm222, %v194, %v233
    %v235 = vrot.slane %v219, 7
    %v236 = vsel %vm225, %v235, %v234
    %v237 = vsel %vm227, %v235, %v236
    %v238 = vsel %vm229, %v235, %v237
    %v239 = vsel %vm231, %v235, %v238
    %v242 = vadd.f32 %v59, %v232
    %v243 = vadd.f32 %v60, %v239
    %244 = vst [vmem:[#allocation2] sm:$0xff] %v242
    %245 = vst [vmem:[#allocation2 + $0x8] sm:$0xf] %v243
    // Predicated region
    $region22: #{tpu_custom_call.1} parent=1 // pred_check
      %p246 = pneg %p29
    $region23: #{tpu_custom_call.1} parent=1 // pred_check_branch
      %248 = sbr.rel (%p246) target = $region25
    $region24: #{tpu_custom_call.1} parent=1 // pred_region
      %v249 = vld [vmem:[#allocation2] sm:$0xff]
      %v250 = vld [vmem:[#allocation2 + $0x8] sm:$0xf]
      %v251 = vmul.f32 %v249, 0.083333336
      %v252 = vmul.f32 %v250, 0.083333336
      %v253 = vld [vmem:[#allocation3] sm:$0xff]
      %v254 = vld [vmem:[#allocation3 + $0x8] sm:$0xff]
      %v255 = vld [vmem:[#allocation3 + $0x10] sm:$0xff]
      %v256 = vld [vmem:[#allocation3 + $0x18] sm:$0xff]
      %v257 = vld [vmem:[#allocation3 + $0x20] sm:$0xff]
      %v258 = vld [vmem:[#allocation3 + $0x28] sm:$0xff]
      %v259 = vld [vmem:[#allocation3 + $0x30] sm:$0xff]
      %v260 = vld [vmem:[#allocation3 + $0x38] sm:$0xff]
      %v261 = vld [vmem:[#allocation3 + $0x40] sm:$0xff]
      %v262 = vld [vmem:[#allocation3 + $0x48] sm:$0xff]
      %v263 = vld [vmem:[#allocation3 + $0x50] sm:$0xff]
      %v264 = vld [vmem:[#allocation3 + $0x58] sm:$0xff]
      %v265 = vld [vmem:[#allocation3 + $0x60] sm:$0xff]
      %v266 = vld [vmem:[#allocation3 + $0x68] sm:$0xff]
      %v267 = vld [vmem:[#allocation3 + $0x70] sm:$0xff]
      %v268 = vld [vmem:[#allocation3 + $0x78] sm:$0xff]
      %v269 = vld [vmem:[#allocation3 + $0x80] sm:$0xff]
      %v270 = vld [vmem:[#allocation3 + $0x88] sm:$0xff]
      %v271 = vld [vmem:[#allocation3 + $0x90] sm:$0xff]
      %v272 = vld [vmem:[#allocation3 + $0x98] sm:$0xff]
      %v273 = vld [vmem:[#allocation3 + $0xa0] sm:$0xff]
      %v274 = vld [vmem:[#allocation3 + $0xa8] sm:$0xff]
      %v275 = vld [vmem:[#allocation3 + $0xb0] sm:$0xff]
      %v276 = vld [vmem:[#allocation3 + $0xb8] sm:$0xff]
      %v277 = vld [vmem:[#allocation3 + $0xc0] sm:$0xff]
      %v278 = vld [vmem:[#allocation3 + $0xc8] sm:$0xff]
      %v279 = vld [vmem:[#allocation3 + $0xd0] sm:$0xff]
      %v280 = vld [vmem:[#allocation3 + $0xd8] sm:$0xff]
      %v281 = vld [vmem:[#allocation3 + $0xe0] sm:$0xff]
      %v282 = vld [vmem:[#allocation3 + $0xe8] sm:$0xff]
      %v283 = vld [vmem:[#allocation3 + $0xf0] sm:$0xff]
      %v284 = vld [vmem:[#allocation3 + $0xf8] sm:$0xff]
      %v285 = vld [vmem:[#allocation3 + $0x100] sm:$0xff]
      %v286 = vld [vmem:[#allocation3 + $0x108] sm:$0xff]
      %v287 = vld [vmem:[#allocation3 + $0x110] sm:$0xff]
      %v288 = vld [vmem:[#allocation3 + $0x118] sm:$0xff]
      %v289 = vld [vmem:[#allocation3 + $0x120] sm:$0xff]
      %v290 = vld [vmem:[#allocation3 + $0x128] sm:$0xff]
      %v291 = vld [vmem:[#allocation3 + $0x130] sm:$0xff]
      %v292 = vld [vmem:[#allocation3 + $0x138] sm:$0xff]
      %v293 = vld [vmem:[#allocation3 + $0x140] sm:$0xff]
      %v294 = vld [vmem:[#allocation3 + $0x148] sm:$0xff]
      %v295 = vld [vmem:[#allocation3 + $0x150] sm:$0xff]
      %v296 = vld [vmem:[#allocation3 + $0x158] sm:$0xff]
      %v297 = vld [vmem:[#allocation3 + $0x160] sm:$0xff]
      %v298 = vld [vmem:[#allocation3 + $0x168] sm:$0xff]
      %v299 = vld [vmem:[#allocation3 + $0x170] sm:$0xff]
      %v300 = vld [vmem:[#allocation3 + $0x178] sm:$0xff]
      %v301 = vld [vmem:[#allocation3 + $0x180] sm:$0xff]
      %v302 = vld [vmem:[#allocation3 + $0x188] sm:$0xff]
      %v303 = vld [vmem:[#allocation3 + $0x190] sm:$0xff]
      %v304 = vld [vmem:[#allocation3 + $0x198] sm:$0xff]
      %v305 = vld [vmem:[#allocation3 + $0x1a0] sm:$0xff]
      %v306 = vld [vmem:[#allocation3 + $0x1a8] sm:$0xff]
      %v307 = vld [vmem:[#allocation3 + $0x1b0] sm:$0xff]
      %v308 = vld [vmem:[#allocation3 + $0x1b8] sm:$0xff]
      %v309 = vld [vmem:[#allocation3 + $0x1c0] sm:$0xff]
      %v310 = vld [vmem:[#allocation3 + $0x1c8] sm:$0xff]
      %v311 = vld [vmem:[#allocation3 + $0x1d0] sm:$0xff]
      %v312 = vld [vmem:[#allocation3 + $0x1d8] sm:$0xff]
      %v313 = vld [vmem:[#allocation3 + $0x1e0] sm:$0xff]
      %v314 = vld [vmem:[#allocation3 + $0x1e8] sm:$0xff]
      %v315 = vld [vmem:[#allocation3 + $0x1f0] sm:$0xff]
      %v316 = vld [vmem:[#allocation3 + $0x1f8] sm:$0xff]
      %v317 = vld [vmem:[#allocation3 + $0x200] sm:$0xff]
      %v318 = vld [vmem:[#allocation3 + $0x208] sm:$0xff]
      %v319 = vld [vmem:[#allocation3 + $0x210] sm:$0xff]
      %v320 = vld [vmem:[#allocation3 + $0x218] sm:$0xff]
      %v321 = vld [vmem:[#allocation3 + $0x220] sm:$0xff]
      %v322 = vld [vmem:[#allocation3 + $0x228] sm:$0xff]
      %v323 = vld [vmem:[#allocation3 + $0x230] sm:$0xff]
      %v324 = vld [vmem:[#allocation3 + $0x238] sm:$0xff]
      %v325 = vld [vmem:[#allocation3 + $0x240] sm:$0xff]
      %v326 = vld [vmem:[#allocation3 + $0x248] sm:$0xff]
      %v327 = vld [vmem:[#allocation3 + $0x250] sm:$0xff]
      %v328 = vld [vmem:[#allocation3 + $0x258] sm:$0xff]
      %v329 = vld [vmem:[#allocation3 + $0x260] sm:$0xff]
      %v330 = vld [vmem:[#allocation3 + $0x268] sm:$0xff]
      %v331 = vld [vmem:[#allocation3 + $0x270] sm:$0xff]
      %v332 = vld [vmem:[#allocation3 + $0x278] sm:$0xff]
      %v333 = vld [vmem:[#allocation3 + $0x280] sm:$0xff]
      %v334 = vld [vmem:[#allocation3 + $0x288] sm:$0xff]
      %v335 = vld [vmem:[#allocation3 + $0x290] sm:$0xff]
      %v336 = vld [vmem:[#allocation3 + $0x298] sm:$0xff]
      %v337 = vld [vmem:[#allocation3 + $0x2a0] sm:$0xff]
      %v338 = vld [vmem:[#allocation3 + $0x2a8] sm:$0xff]
      %v339 = vld [vmem:[#allocation3 + $0x2b0] sm:$0xff]
      %v340 = vld [vmem:[#allocation3 + $0x2b8] sm:$0xff]
      %v341 = vld [vmem:[#allocation3 + $0x2c0] sm:$0xff]
      %v342 = vld [vmem:[#allocation3 + $0x2c8] sm:$0xff]
      %v343 = vld [vmem:[#allocation3 + $0x2d0] sm:$0xff]
      %v344 = vld [vmem:[#allocation3 + $0x2d8] sm:$0xff]
      %v345 = vld [vmem:[#allocation3 + $0x2e0] sm:$0xff]
      %v346 = vld [vmem:[#allocation3 + $0x2e8] sm:$0xff]
      %v347 = vld [vmem:[#allocation3 + $0x2f0] sm:$0xff]
      %v348 = vld [vmem:[#allocation3 + $0x2f8] sm:$0xff]
      %v349 = vld [vmem:[%s2] sm:$0x1]
      %v351 = vlaneseq
      %v352 = vshrl.u32 %v351, 7
      %v353 = vsub.s32 0, %v352
      %v354 = vrot.slane %v349, %v353
      %v358 = vcombine.high %v251, %v251
      %v360 = vunpack.c.l.s4 1983009808
      %v361 = vunpack.c.0.s8 %v360
      %v362 = vlaneseq
      %v363 = vshrl.u32 %v362, 7
      %v364 = vsub.s32 %v361, %v363
      %v365 = vrot.slane %v251, %v364
      %v367 = vunpack.c.l.s4 1983009808
      %v368 = vunpack.c.0.s8 %v367
      %v369 = vlaneseq
      %v370 = vshrl.u32 %v369, 7
      %v371 = vsub.s32 %v368, %v370
      %v372 = vrot.slane %v358, %v371
      %v373 = vcombine.high %v365, %v365
      %v374 = vcombine.high %v372, %v372
      %v376 = vunpack.c.l.s4 1983009808
      %v377 = vunpack.c.0.s8 %v376
      %v378 = vlaneseq
      %v379 = vshrl.u32 %v378, 7
      %v380 = vsub.s32 %v377, %v379
      %v381 = vrot.slane %v252, %v380
      %v382 = vcombine.high %v381, %v381
      %389 = vmatprep.subr.mxu0 0.0
      %390 = vmatpush1.msra.mxu0 %v253
      %391 = vmatprep.subr.mxu0 0.0
      %392 = vmatpush1.msra.mxu0 %v254
      %393 = vmatprep.subr.mxu0 0.0
      %394 = vmatpush1.msra.mxu0 %v255
      %395 = vmatprep.subr.mxu0 0.0
      %396 = vmatpush1.msra.mxu0 %v256
      %397 = vmatprep.subr.mxu0 0.0
      %398 = vmatpush1.msra.mxu0 %v257
      %399 = vmatprep.subr.mxu0 0.0
      %400 = vmatpush1.msra.mxu0 %v258
      %401 = vmatprep.subr.mxu0 0.0
      %402 = vmatpush1.msra.mxu0 %v259
      %403 = vmatprep.subr.mxu0 0.0
      %404 = vmatpush1.msra.mxu0 %v260
      %405 = vmatprep.subr.mxu0 0.0
      %406 = vmatpush1.msra.mxu0 %v261
      %407 = vmatprep.subr.mxu0 0.0
      %408 = vmatpush1.msra.mxu0 %v262
      %409 = vmatprep.subr.mxu0 0.0
      %410 = vmatpush1.msra.mxu0 %v263
      %411 = vmatprep.subr.mxu0 0.0
      %412 = vmatpush1.msra.mxu0 %v264
      %413 = vmatprep.subr.mxu0 0.0
      %414 = vmatpush1.msra.mxu0 %v265
      %415 = vmatprep.subr.mxu0 0.0
      %416 = vmatpush1.msra.mxu0 %v266
      %417 = vmatprep.subr.mxu0 0.0
      %418 = vmatpush1.msra.mxu0 %v267
      %419 = vmatprep.subr.mxu0 0.0
      %420 = vmatpush1.msra.mxu0 %v268
      %421 = vmatprep.subr.mxu0 0.0
      %422 = vmatpush1.msra.mxu0 %v269
      %423 = vmatprep.subr.mxu0 0.0
      %424 = vmatpush1.msra.mxu0 %v270
      %425 = vmatprep.subr.mxu0 0.0
      %426 = vmatpush1.msra.mxu0 %v271
      %427 = vmatprep.subr.mxu0 0.0
      %428 = vmatpush1.msra.mxu0 %v272
      %429 = vmatprep.subr.mxu0 0.0
      %430 = vmatpush1.msra.mxu0 %v273
      %431 = vmatprep.subr.mxu0 0.0
      %432 = vmatpush1.msra.mxu0 %v274
      %433 = vmatprep.subr.mxu0 0.0
      %434 = vmatpush1.msra.mxu0 %v275
      %435 = vmatprep.subr.mxu0 0.0
      %436 = vmatpush1.msra.mxu0 %v276
      %437 = vmatprep.subr.mxu0 0.0
      %438 = vmatpush1.msra.mxu0 %v277
      %439 = vmatprep.subr.mxu0 0.0
      %440 = vmatpush1.msra.mxu0 %v278
      %441 = vmatprep.subr.mxu0 0.0
      %442 = vmatpush1.msra.mxu0 %v279
      %443 = vmatprep.subr.mxu0 0.0
      %444 = vmatpush1.msra.mxu0 %v280
      %445 = vmatprep.subr.mxu0 0.0
      %446 = vmatpush1.msra.mxu0 %v281
      %447 = vmatprep.subr.mxu0 0.0
      %448 = vmatpush1.msra.mxu0 %v282
      %449 = vmatprep.subr.mxu0 0.0
      %450 = vmatpush1.msra.mxu0 %v283
      %451 = vmatprep.subr.mxu0 0.0
      %452 = vmatpush1.msra.mxu0 %v284
      %453 = vmatprep.mubr.f32.mxu0 %v373
      %454 = vmatmul.mubr.f32.gmra.mrb[0].mxu0 %v365
      %v455 = vpop.f32.mrb[0].mxu0
      %v456 = vadd.f32 %v354, %v455
      %v457 = vpop.f32.mrb[0].mxu0
      %458 = vdwg.mxu0
      %459 = vmatprep.subr.mxu0 0.0
      %460 = vmatpush1.msra.mxu0 %v285
      %461 = vmatprep.subr.mxu0 0.0
      %462 = vmatpush1.msra.mxu0 %v286
      %463 = vmatprep.subr.mxu0 0.0
      %464 = vmatpush1.msra.mxu0 %v287
      %465 = vmatprep.subr.mxu0 0.0
      %466 = vmatpush1.msra.mxu0 %v288
      %467 = vmatprep.subr.mxu0 0.0
      %468 = vmatpush1.msra.mxu0 %v289
      %469 = vmatprep.subr.mxu0 0.0
      %470 = vmatpush1.msra.mxu0 %v290
      %471 = vmatprep.subr.mxu0 0.0
      %472 = vmatpush1.msra.mxu0 %v291
      %473 = vmatprep.subr.mxu0 0.0
      %474 = vmatpush1.msra.mxu0 %v292
      %475 = vmatprep.subr.mxu0 0.0
      %476 = vmatpush1.msra.mxu0 %v293
      %477 = vmatprep.subr.mxu0 0.0
      %478 = vmatpush1.msra.mxu0 %v294
      %479 = vmatprep.subr.mxu0 0.0
      %480 = vmatpush1.msra.mxu0 %v295
      %481 = vmatprep.subr.mxu0 0.0
      %482 = vmatpush1.msra.mxu0 %v296
      %483 = vmatprep.subr.mxu0 0.0
      %484 = vmatpush1.msra.mxu0 %v297
      %485 = vmatprep.subr.mxu0 0.0
      %486 = vmatpush1.msra.mxu0 %v298
      %487 = vmatprep.subr.mxu0 0.0
      %488 = vmatpush1.msra.mxu0 %v299
      %489 = vmatprep.subr.mxu0 0.0
      %490 = vmatpush1.msra.mxu0 %v300
      %491 = vmatprep.subr.mxu0 0.0
      %492 = vmatpush1.msra.mxu0 %v301
      %493 = vmatprep.subr.mxu0 0.0
      %494 = vmatpush1.msra.mxu0 %v302
      %495 = vmatprep.subr.mxu0 0.0
      %496 = vmatpush1.msra.mxu0 %v303
      %497 = vmatprep.subr.mxu0 0.0
      %498 = vmatpush1.msra.mxu0 %v304
      %499 = vmatprep.subr.mxu0 0.0
      %500 = vmatpush1.msra.mxu0 %v305
      %501 = vmatprep.subr.mxu0 0.0
      %502 = vmatpush1.msra.mxu0 %v306
      %503 = vmatprep.subr.mxu0 0.0
      %504 = vmatpush1.msra.mxu0 %v307
      %505 = vmatprep.subr.mxu0 0.0
      %506 = vmatpush1.msra.mxu0 %v308
      %507 = vmatprep.subr.mxu0 0.0
      %508 = vmatpush1.msra.mxu0 %v309
      %509 = vmatprep.subr.mxu0 0.0
      %510 = vmatpush1.msra.mxu0 %v310
      %511 = vmatprep.subr.mxu0 0.0
      %512 = vmatpush1.msra.mxu0 %v311
      %513 = vmatprep.subr.mxu0 0.0
      %514 = vmatpush1.msra.mxu0 %v312
      %515 = vmatprep.subr.mxu0 0.0
      %516 = vmatpush1.msra.mxu0 %v313
      %517 = vmatprep.subr.mxu0 0.0
      %518 = vmatpush1.msra.mxu0 %v314
      %519 = vmatprep.subr.mxu0 0.0
      %520 = vmatpush1.msra.mxu0 %v315
      %521 = vmatprep.subr.mxu0 0.0
      %522 = vmatpush1.msra.mxu0 %v316
      %523 = vmatprep.mubr.f32.mxu0 %v374
      %524 = vmatmul.mubr.f32.gmra.mrb[0].mxu0 %v372
      %v525 = vpop.f32.mrb[0].mxu0
      %v526 = vadd.f32 %v456, %v525
      %v527 = vpop.f32.mrb[0].mxu0
      %528 = vdwg.mxu0
      %529 = vmatprep.subr.mxu0 0.0
      %530 = vmatpush1.msra.mxu0 %v317
      %531 = vmatprep.subr.mxu0 0.0
      %532 = vmatpush1.msra.mxu0 %v318
      %533 = vmatprep.subr.mxu0 0.0
      %534 = vmatpush1.msra.mxu0 %v319
      %535 = vmatprep.subr.mxu0 0.0
      %536 = vmatpush1.msra.mxu0 %v320
      %537 = vmatprep.subr.mxu0 0.0
      %538 = vmatpush1.msra.mxu0 %v321
      %539 = vmatprep.subr.mxu0 0.0
      %540 = vmatpush1.msra.mxu0 %v322
      %541 = vmatprep.subr.mxu0 0.0
      %542 = vmatpush1.msra.mxu0 %v323
      %543 = vmatprep.subr.mxu0 0.0
      %544 = vmatpush1.msra.mxu0 %v324
      %545 = vmatprep.subr.mxu0 0.0
      %546 = vmatpush1.msra.mxu0 %v325
      %547 = vmatprep.subr.mxu0 0.0
      %548 = vmatpush1.msra.mxu0 %v326
      %549 = vmatprep.subr.mxu0 0.0
      %550 = vmatpush1.msra.mxu0 %v327
      %551 = vmatprep.subr.mxu0 0.0
      %552 = vmatpush1.msra.mxu0 %v328
      %553 = vmatprep.subr.mxu0 0.0
      %554 = vmatpush1.msra.mxu0 %v329
      %555 = vmatprep.subr.mxu0 0.0
      %556 = vmatpush1.msra.mxu0 %v330
      %557 = vmatprep.subr.mxu0 0.0
      %558 = vmatpush1.msra.mxu0 %v331
      %559 = vmatprep.subr.mxu0 0.0
      %560 = vmatpush1.msra.mxu0 %v332
      %561 = vmatprep.subr.mxu0 0.0
      %562 = vmatpush1.msra.mxu0 %v333
      %563 = vmatprep.subr.mxu0 0.0
      %564 = vmatpush1.msra.mxu0 %v334
      %565 = vmatprep.subr.mxu0 0.0
      %566 = vmatpush1.msra.mxu0 %v335
      %567 = vmatprep.subr.mxu0 0.0
      %568 = vmatpush1.msra.mxu0 %v336
      %569 = vmatprep.subr.mxu0 0.0
      %570 = vmatpush1.msra.mxu0 %v337
      %571 = vmatprep.subr.mxu0 0.0
      %572 = vmatpush1.msra.mxu0 %v338
      %573 = vmatprep.subr.mxu0 0.0
      %574 = vmatpush1.msra.mxu0 %v339
      %575 = vmatprep.subr.mxu0 0.0
      %576 = vmatpush1.msra.mxu0 %v340
      %577 = vmatprep.subr.mxu0 0.0
      %578 = vmatpush1.msra.mxu0 %v341
      %579 = vmatprep.subr.mxu0 0.0
      %580 = vmatpush1.msra.mxu0 %v342
      %581 = vmatprep.subr.mxu0 0.0
      %582 = vmatpush1.msra.mxu0 %v343
      %583 = vmatprep.subr.mxu0 0.0
      %584 = vmatpush1.msra.mxu0 %v344
      %585 = vmatprep.subr.mxu0 0.0
      %586 = vmatpush1.msra.mxu0 %v345
      %587 = vmatprep.subr.mxu0 0.0
      %588 = vmatpush1.msra.mxu0 %v346
      %589 = vmatprep.subr.mxu0 0.0
      %590 = vmatpush1.msra.mxu0 %v347
      %591 = vmatprep.subr.mxu0 0.0
      %592 = vmatpush1.msra.mxu0 %v348
      %593 = vmatprep.mubr.f32.mxu0 %v382
      %594 = vmatmul.mubr.f32.gmra.mrb[0].mxu0 %v381
      %v595 = vpop.f32.mrb[0].mxu0
      %v596 = vadd.f32 %v526, %v595
      %v597 = vpop.f32.mrb[0].mxu0
      %598 = vdwg.mxu0
      %599 = vst [vmem:[#allocation6] sm:$0x3] %v596
    $region25: #{tpu_custom_call.1} parent=1 // pred_fallthru
      _
    // Predicated region
    $region26: #{tpu_custom_call.1} parent=1 // pred_check
      _
    $region27: #{tpu_custom_call.1} parent=1 // pred_check_branch
      %601 = sbr.rel (0) target = $region29
    $region28: #{tpu_custom_call.1} parent=1 // pred_region
      %s603 = ssub.s32 32, 32
      %604 = vsyncadd [#allocation5], %s603
      %s606 = sshll.u32 [#allocation6], 4
      %s607 = int_to_ptr.vmem [resolvable:$true] %s606
      %609 = dma.vmem_to_hbm [thread:$0]  %s607, 32, %s3, [#allocation5]
    $region29: #{tpu_custom_call.1} parent=1 // pred_fallthru
      _
    // Predicated region
    $region30: #{tpu_custom_call.1} parent=1 // pred_check
      _
    $region31: #{tpu_custom_call.1} parent=1 // pred_check_branch
      %611 = sbr.rel (0) target = $region33
    $region32: #{tpu_custom_call.1} parent=1 // pred_region
      %612 = dma.done [#allocation5], 32
    $region33: #{tpu_custom_call.1} parent=1 // pred_fallthru
      _
    %613 = vsyncpa [#allocation4], 1
    %614 = vsyncpa [#allocation5], 1

</llo_original>
